<compile_context>
chip_gen: v6e
topology: v6e:2x2x1
jax: 0.10.0
libtpu: 0.0.40
codegen_flags: <defaults>
</compile_context>

<pallas_src>
from functools import partial
from math import sqrt

import jax
import jax.numpy as jnp
from jax.experimental import pallas as pl
from jax.experimental.pallas import tpu as pltpu

LANE = 128      # TPU lane width
SUBLANE = 8     # TPU sublane width

# Conservative budget for resident params + pipeline buffers; fits every
# generation once vmem_limit_bytes is raised (v7x physical VMEM is 64 MiB/TC).
_VMEM_PIPELINE_BUDGET = 20 * 1024 * 1024

_SINGLE_BUFFER_OK = None  # set once by _probe_single_buffered()


def _round_up(x, m):
    return ((x + m - 1) // m) * m


def _cdiv(a, b):
    return (a + b - 1) // b


def _probe_single_buffered():
    """Check once (eagerly, outside any trace) whether pipeline_mode=pl.Buffered(1)
    works on this JAX/TPU combo. Single-buffering the VMEM-resident weights halves
    their footprint; if unsupported we silently fall back to plain specs."""
    global _SINGLE_BUFFER_OK
    if _SINGLE_BUFFER_OK is not None:
        return _SINGLE_BUFFER_OK
    try:
        def _probe_kernel(x_ref, o_ref):
            o_ref[...] = x_ref[...] + 1.0

        probe = pl.pallas_call(
            _probe_kernel,
            out_shape=jax.ShapeDtypeStruct((2 * SUBLANE, LANE), jnp.float32),
            grid=(2,),
            in_specs=[pl.BlockSpec((SUBLANE, LANE), lambda i: (0, 0),
                                   pipeline_mode=pl.Buffered(1))],
            out_specs=pl.BlockSpec((SUBLANE, LANE), lambda i: (i, 0)),
        )
        jax.block_until_ready(jax.jit(probe)(jnp.zeros((SUBLANE, LANE), jnp.float32)))
        _SINGLE_BUFFER_OK = True
    except Exception:
        _SINGLE_BUFFER_OK = False
    return _SINGLE_BUFFER_OK


def _resident_spec(shape):
    """BlockSpec for a parameter that stays VMEM-resident across all row tiles."""
    if _SINGLE_BUFFER_OK:
        return pl.BlockSpec(shape, lambda i: (0, 0), pipeline_mode=pl.Buffered(1))
    return pl.BlockSpec(shape, lambda i: (0, 0))


def _fused_mlp_kernel(*refs, num_layers, matmul_dtype):
    """refs = (x_ref, w0, b0, ..., w{L-1}, b{L-1}, o_ref).

    x_ref: (TILE_N, D_in); w_i: (K_i, N_i) already in MXU-canonical K-major layout
    (pre-transposed in the wrapper -> no in-kernel transpose); b_i: (1, N_i);
    o_ref: (TILE_N, D_out). The whole layer stack runs on one row tile in VMEM.
    """
    x_ref, o_ref = refs[0], refs[-1]
    prm = refs[1:-1]
    h = x_ref[...]
    for layer in range(num_layers):
        w = prm[2 * layer][...]
        b = prm[2 * layer + 1][...]
        lhs = h if matmul_dtype is None else h.astype(matmul_dtype)
        rhs = w if matmul_dtype is None else w.astype(matmul_dtype)
        # (TILE_N, K) @ (K, N) on the MXU with f32 accumulation; bias + ReLU
        # stay in f32 on the VPU (v5e has no bf16 VPU datapath).
        h = jnp.dot(lhs, rhs, preferred_element_type=jnp.float32) + b
        if layer < num_layers - 1:
            h = jnp.maximum(h, 0.0)
    o_ref[...] = h.astype(o_ref.dtype)


def prepare_mlp_params(params, matmul_dtype=None):
    """One-time parameter prep (hoisted out of the per-call path).

    Transposes each PyTorch-layout (D_out, D_in) weight to (D_in, D_out) so the
    kernel's dot is a plain (M,K)@(K,N) contraction (no per-tile transpose) and
    optionally stores weights in bf16 for the v6e/v7x MXU. Biases stay f32.
    Also probes Buffered(1) support once, eagerly.
    """
    _probe_single_buffered()
    w_dtype = jnp.float32 if matmul_dtype is None else jnp.dtype(matmul_dtype)
    flat = []
    for w, b in params:
        flat.append(jnp.asarray(w, jnp.float32).T.astype(w_dtype))     # (K, N)
        flat.append(jnp.asarray(b, jnp.float32).reshape(1, -1))        # (1, N)
    return tuple(flat)


def _choose_tile_n(n, d_in, layer_widths, param_bytes, tile_n_max):
    """Row-tile size from a VMEM budget: resident params (single-buffered when
    possible) + double-buffered x/out pipeline tiles + widest-intermediate headroom."""
    d_out = layer_widths[-1]
    max_w = max([d_in] + list(layer_widths))
    per_row = 4 * (2 * d_in + 2 * d_out + 2 * max_w)          # f32 bytes per tile row
    avail = max(_VMEM_PIPELINE_BUDGET - param_bytes, per_row * SUBLANE)
    tile = max(SUBLANE, (avail // per_row) // SUBLANE * SUBLANE)
    tile = min(tile, tile_n_max)
    # Keep >= 2 grid steps when the batch allows so the "parallel" row axis can
    # shard across v7x's 2 TensorCores (and DMA/compute overlap elsewhere).
    if n > SUBLANE:
        tile = min(tile, max(SUBLANE, _round_up(_cdiv(n, 2), SUBLANE)))
    tile = min(tile, _round_up(n, SUBLANE))
    return int(tile)


@partial(jax.jit, static_argnames=("tile_n_max", "matmul_dtype"))
def mlp_forward(x, prepared, tile_n_max=1024, matmul_dtype=None):
    """Fused MLP forward. `prepared` comes from prepare_mlp_params().

    x: (N, input_dim) f32. Returns (N, output_dim) f32 with no padding/slicing.
    """
    n, d_in = x.shape
    num_layers = len(prepared) // 2
    widths = [int(prepared[2 * l].shape[1]) for l in range(num_layers)]
    d_out = widths[-1]

    param_bytes = sum(int(a.size) * a.dtype.itemsize for a in prepared)
    tile_n = _choose_tile_n(n, d_in, widths, param_bytes, tile_n_max)
    grid = (_cdiv(n, tile_n),)   # ragged final block handled by Pallas OOB masking

    in_specs = [pl.BlockSpec((tile_n, d_in), lambda i: (i, 0))]
    for l in range(num_layers):
        in_specs.append(_resident_spec(prepared[2 * l].shape))      # weight (K, N)
        in_specs.append(_resident_spec(prepared[2 * l + 1].shape))  # bias (1, N)
    out_specs = pl.BlockSpec((tile_n, d_out), lambda i: (i, 0))

    flops = sum(2 * n * int(prepared[2 * l].shape[0]) * int(prepared[2 * l].shape[1])
                for l in range(num_layers))
    bytes_accessed = int(x.size) * x.dtype.itemsize + n * d_out * 4 + param_bytes

    # Pipeline buffers + resident params with headroom; raise the scoped-VMEM
    # limit explicitly (v5e default is 16 MiB), stay <= v7x's 64 MiB physical.
    vmem_est = param_bytes * (1 if _SINGLE_BUFFER_OK else 2) \
        + tile_n * 4 * (2 * d_in + 2 * d_out + 2 * max([d_in] + widths))
    vmem_limit = int(min(64 * 1024 * 1024, max(32 * 1024 * 1024, 2 * vmem_est)))

    # TODO(synk): for very wide layers (hidden >= ~2K) whole-layer weight residency
    # should be replaced by a K-tiled reduction grid with an f32 accumulator
    # scratch (P3 pattern); not needed at these shapes.
    return pl.pallas_call(
        partial(_fused_mlp_kernel, num_layers=num_layers, matmul_dtype=matmul_dtype),
        out_shape=jax.ShapeDtypeStruct((n, d_out), x.dtype),
        grid=grid,
        in_specs=in_specs,
        out_specs=out_specs,
        compiler_params=pltpu.CompilerParams(
            dimension_semantics=("parallel",),
            vmem_limit_bytes=vmem_limit),
        cost_estimate=pl.CostEstimate(
            flops=flops, transcendentals=0, bytes_accessed=bytes_accessed),
    )(x, *prepared)


def init_mlp_params(key, num_layers, input_dim, hidden_dim, output_dim):
    """Deterministic parameter init mirroring MLP.__init__ / initialize_weights.

    Weights ~ U(-stdv, stdv) with stdv from initialize_weights; biases keep
    PyTorch nn.Linear default U(-1/sqrt(fan_in), 1/sqrt(fan_in)).
    """
    if num_layers < 1:
        raise ValueError("number of layers should be positive!")
    if num_layers == 1:
        dims = [(input_dim, output_dim)]
        w_stdvs = [1.0 / sqrt(output_dim)]
    else:
        dims = [(input_dim, hidden_dim)]
        dims += [(hidden_dim, hidden_dim)] * (num_layers - 2)
        dims += [(hidden_dim, output_dim)]
        w_stdvs = [1.0 / sqrt(hidden_dim)] * num_layers
    params = []
    for (fan_in, fan_out), w_stdv in zip(dims, w_stdvs):
        key, kw, kb = jax.random.split(key, 3)
        w = jax.random.uniform(kw, (fan_out, fan_in), jnp.float32, -w_stdv, w_stdv)
        b_stdv = 1.0 / sqrt(fan_in)
        b = jax.random.uniform(kb, (fan_out,), jnp.float32, -b_stdv, b_stdv)
        params.append((w, b))
    return params


def mlp_reference(x, params):
    """Pure-JAX reference matching the PyTorch forward."""
    if len(params) == 1:
        w, b = params[0]
        return x @ w.T + b
    h = x
    for w, b in params[:-1]:
        h = jax.nn.relu(h @ w.T + b)
    w, b = params[-1]
    return h @ w.T + b


if __name__ == "__main__":
    key = jax.random.PRNGKey(0)

    # Case 1: 3-layer MLP, small shapes.
    num_layers, input_dim, hidden_dim, output_dim, batch = 3, 16, 32, 8, 8
    key, kx = jax.random.split(key)
    x = jax.random.normal(kx, (batch, input_dim), jnp.float32)
    params = init_mlp_params(key, num_layers, input_dim, hidden_dim, output_dim)
    prepared = prepare_mlp_params(params)
    out = jax.block_until_ready(mlp_forward(x, prepared))
    ref = mlp_reference(x, params)
    assert out.shape == (batch, output_dim)
    assert jnp.allclose(out, ref, atol=1e-5, rtol=1e-5)

    # Case 2: 2-layer MLP with a ragged batch (exercises the cdiv row grid,
    # >= 2 grid steps, and the masked partial final block).
    num_layers, input_dim, hidden_dim, output_dim, batch = 2, 24, 48, 10, 200
    key, kx = jax.random.split(key)
    x = jax.random.normal(kx, (batch, input_dim), jnp.float32)
    params = init_mlp_params(key, num_layers, input_dim, hidden_dim, output_dim)
    prepared = prepare_mlp_params(params)
    out = jax.block_until_ready(mlp_forward(x, prepared))
    ref = mlp_reference(x, params)
    assert out.shape == (batch, output_dim)
    assert jnp.allclose(out, ref, atol=1e-5, rtol=1e-5)

    # Case 3: num_layers == 1 (pure Linear path).
    num_layers, input_dim, hidden_dim, output_dim, batch = 1, 16, 32, 8, 8
    key, kx = jax.random.split(key)
    x = jax.random.normal(kx, (batch, input_dim), jnp.float32)
    params = init_mlp_params(key, num_layers, input_dim, hidden_dim, output_dim)
    prepared = prepare_mlp_params(params)
    out = jax.block_until_ready(mlp_forward(x, prepared))
    ref = mlp_reference(x, params)
    assert out.shape == (batch, output_dim)
    assert jnp.allclose(out, ref, atol=1e-5, rtol=1e-5)

    print("KERNEL_OK")
</pallas_src>

<mosaic_0001>
module attributes {stable_mosaic.version = 11 : i64} {
  func.func @_probe_kernel(%arg0: i32, %arg1: memref<8x128xf32, #tpu.memory_space<vmem>>, %arg2: memref<8x128xf32, #tpu.memory_space<vmem>>) attributes {dimension_semantics = [#tpu.dimension_semantics<arbitrary>], iteration_bounds = array<i64: 2>, scalar_prefetch = 0 : i64, scratch_operands = 0 : i64, tpu.core_type = #tpu.core_type<tc>, window_params = [{pipeline_mode = #tpu.pipeline_mode<synchronous>, transform_indices = @transform_0, window_bounds = array<i64: 8, 128>}, {transform_indices = @transform_1, window_bounds = array<i64: 8, 128>}]} {
    %c0 = arith.constant 0 : index
    %c0_0 = arith.constant 0 : index
    %0 = vector.load %arg1[%c0, %c0_0] : memref<8x128xf32, #tpu.memory_space<vmem>>, vector<8x128xf32>
    %cst = arith.constant 1.000000e+00 : f32
    %1 = vector.broadcast %cst : f32 to vector<8x128xf32>
    %2 = arith.addf %0, %1 : vector<8x128xf32>
    %c0_1 = arith.constant 0 : index
    %c0_2 = arith.constant 0 : index
    %3 = vector.load %arg2[%c0_1, %c0_2] : memref<8x128xf32, #tpu.memory_space<vmem>>, vector<8x128xf32>
    tpu.vector_store %arg2[%c0_1, %c0_2], %2 {strides = array<i32>} : memref<8x128xf32, #tpu.memory_space<vmem>>, vector<8x128xf32>,
    return
  }
  func.func @transform_0(%arg0: i32) -> (i32, i32) {
    %c0_i32 = arith.constant 0 : i32
    %c0_i32_0 = arith.constant 0 : i32
    %c0_i32_1 = arith.constant 0 : i32
    return %c0_i32, %c0_i32_0 : i32, i32
  }
  func.func @transform_1(%arg0: i32) -> (i32, i32) {
    %c0_i32 = arith.constant 0 : i32
    %c0_i32_0 = arith.constant 0 : i32
    return %arg0, %c0_i32 : i32, i32
  }
}

module attributes {stable_mosaic.version = 11 : i64} {
  func.func @_fused_mlp_kernel(%arg0: i32, %arg1: memref<8x16xf32, #tpu.memory_space<vmem>>, %arg2: memref<16x32xf32, #tpu.memory_space<vmem>>, %arg3: memref<1x32xf32, #tpu.memory_space<vmem>>, %arg4: memref<32x32xf32, #tpu.memory_space<vmem>>, %arg5: memref<1x32xf32, #tpu.memory_space<vmem>>, %arg6: memref<32x8xf32, #tpu.memory_space<vmem>>, %arg7: memref<1x8xf32, #tpu.memory_space<vmem>>, %arg8: memref<8x8xf32, #tpu.memory_space<vmem>>) attributes {dimension_semantics = [#tpu.dimension_semantics<parallel>], iteration_bounds = array<i64: 1>, scalar_prefetch = 0 : i64, scratch_operands = 0 : i64, tpu.core_type = #tpu.core_type<tc>, window_params = [{transform_indices = @transform_0, window_bounds = array<i64: 8, 16>}, {pipeline_mode = #tpu.pipeline_mode<synchronous>, transform_indices = @transform_1, window_bounds = array<i64: 16, 32>}, {pipeline_mode = #tpu.pipeline_mode<synchronous>, transform_indices = @transform_2, window_bounds = array<i64: 1, 32>}, {pipeline_mode = #tpu.pipeline_mode<synchronous>, transform_indices = @transform_3, window_bounds = array<i64: 32, 32>}, {pipeline_mode = #tpu.pipeline_mode<synchronous>, transform_indices = @transform_4, window_bounds = array<i64: 1, 32>}, {pipeline_mode = #tpu.pipeline_mode<synchronous>, transform_indices = @transform_5, window_bounds = array<i64: 32, 8>}, {pipeline_mode = #tpu.pipeline_mode<synchronous>, transform_indices = @transform_6, window_bounds = array<i64: 1, 8>}, {transform_indices = @transform_7, window_bounds = array<i64: 8, 8>}]} {
    %c0 = arith.constant 0 : index
    %c0_0 = arith.constant 0 : index
    %0 = vector.load %arg1[%c0, %c0_0] : memref<8x16xf32, #tpu.memory_space<vmem>>, vector<8x16xf32>
    %c0_1 = arith.constant 0 : index
    %c0_2 = arith.constant 0 : index
    %1 = vector.load %arg2[%c0_1, %c0_2] : memref<16x32xf32, #tpu.memory_space<vmem>>, vector<16x32xf32>
    %c0_3 = arith.constant 0 : index
    %c0_4 = arith.constant 0 : index
    %2 = vector.load %arg3[%c0_3, %c0_4] : memref<1x32xf32, #tpu.memory_space<vmem>>, vector<1x32xf32>
    %cst = arith.constant dense<0.000000e+00> : vector<8x32xf32>
    %3 = tpu.matmul %0, %1, %cst {dimension_numbers = #tpu.dot_dimension_numbers<[1], [0], [0], [1], [0, 0, 1, 1], [], []>} : vector<8x16xf32>, vector<16x32xf32>, vector<8x32xf32> -> vector<8x32xf32>
    %4 = vector.broadcast %2 : vector<1x32xf32> to vector<8x32xf32>
    %5 = arith.addf %3, %4 : vector<8x32xf32>
    %cst_5 = arith.constant 0.000000e+00 : f32
    %6 = vector.broadcast %cst_5 : f32 to vector<8x32xf32>
    %7 = arith.maximumf %5, %6 : vector<8x32xf32>
    %c0_6 = arith.constant 0 : index
    %c0_7 = arith.constant 0 : index
    %8 = vector.load %arg4[%c0_6, %c0_7] : memref<32x32xf32, #tpu.memory_space<vmem>>, vector<32x32xf32>
    %c0_8 = arith.constant 0 : index
    %c0_9 = arith.constant 0 : index
    %9 = vector.load %arg5[%c0_8, %c0_9] : memref<1x32xf32, #tpu.memory_space<vmem>>, vector<1x32xf32>
    %cst_10 = arith.constant dense<0.000000e+00> : vector<8x32xf32>
    %10 = tpu.matmul %7, %8, %cst_10 {dimension_numbers = #tpu.dot_dimension_numbers<[1], [0], [0], [1], [0, 0, 1, 1], [], []>} : vector<8x32xf32>, vector<32x32xf32>, vector<8x32xf32> -> vector<8x32xf32>
    %11 = vector.broadcast %9 : vector<1x32xf32> to vector<8x32xf32>
    %12 = arith.addf %10, %11 : vector<8x32xf32>
    %cst_11 = arith.constant 0.000000e+00 : f32
    %13 = vector.broadcast %cst_11 : f32 to vector<8x32xf32>
    %14 = arith.maximumf %12, %13 : vector<8x32xf32>
    %c0_12 = arith.constant 0 : index
    %c0_13 = arith.constant 0 : index
    %15 = vector.load %arg6[%c0_12, %c0_13] : memref<32x8xf32, #tpu.memory_space<vmem>>, vector<32x8xf32>
    %c0_14 = arith.constant 0 : index
    %c0_15 = arith.constant 0 : index
    %16 = vector.load %arg7[%c0_14, %c0_15] : memref<1x8xf32, #tpu.memory_space<vmem>>, vector<1x8xf32>
    %cst_16 = arith.constant dense<0.000000e+00> : vector<8x8xf32>
    %17 = tpu.matmul %14, %15, %cst_16 {dimension_numbers = #tpu.dot_dimension_numbers<[1], [0], [0], [1], [0, 0, 1, 1], [], []>} : vector<8x32xf32>, vector<32x8xf32>, vector<8x8xf32> -> vector<8x8xf32>
    %18 = vector.broadcast %16 : vector<1x8xf32> to vector<8x8xf32>
    %19 = arith.addf %17, %18 : vector<8x8xf32>
    %c0_17 = arith.constant 0 : index
    %c0_18 = arith.constant 0 : index
    %20 = vector.load %arg8[%c0_17, %c0_18] : memref<8x8xf32, #tpu.memory_space<vmem>>, vector<8x8xf32>
    tpu.vector_store %arg8[%c0_17, %c0_18], %19 {strides = array<i32>} : memref<8x8xf32, #tpu.memory_space<vmem>>, vector<8x8xf32>,
    return
  }
  func.func @transform_0(%arg0: i32) -> (i32, i32) {
    %c0_i32 = arith.constant 0 : i32
    %c0_i32_0 = arith.constant 0 : i32
    return %arg0, %c0_i32 : i32, i32
  }
  func.func @transform_1(%arg0: i32) -> (i32, i32) {
    %c0_i32 = arith.constant 0 : i32
    %c0_i32_0 = arith.constant 0 : i32
    %c0_i32_1 = arith.constant 0 : i32
    return %c0_i32, %c0_i32_0 : i32, i32
  }
  func.func @transform_2(%arg0: i32) -> (i32, i32) {
    %c0_i32 = arith.constant 0 : i32
    %c0_i32_0 = arith.constant 0 : i32
    %c0_i32_1 = arith.constant 0 : i32
    return %c0_i32, %c0_i32_0 : i32, i32
  }
  func.func @transform_3(%arg0: i32) -> (i32, i32) {
    %c0_i32 = arith.constant 0 : i32
    %c0_i32_0 = arith.constant 0 : i32
    %c0_i32_1 = arith.constant 0 : i32
    return %c0_i32, %c0_i32_0 : i32, i32
  }
  func.func @transform_4(%arg0: i32) -> (i32, i32) {
    %c0_i32 = arith.constant 0 : i32
    %c0_i32_0 = arith.constant 0 : i32
    %c0_i32_1 = arith.constant 0 : i32
    return %c0_i32, %c0_i32_0 : i32, i32
  }
  func.func @transform_5(%arg0: i32) -> (i32, i32) {
    %c0_i32 = arith.constant 0 : i32
    %c0_i32_0 = arith.constant 0 : i32
    %c0_i32_1 = arith.constant 0 : i32
    return %c0_i32, %c0_i32_0 : i32, i32
  }
  func.func @transform_6(%arg0: i32) -> (i32, i32) {
    %c0_i32 = arith.constant 0 : i32
    %c0_i32_0 = arith.constant 0 : i32
    %c0_i32_1 = arith.constant 0 : i32
    return %c0_i32, %c0_i32_0 : i32, i32
  }
  func.func @transform_7(%arg0: i32) -> (i32, i32) {
    %c0_i32 = arith.constant 0 : i32
    %c0_i32_0 = arith.constant 0 : i32
    return %arg0, %c0_i32 : i32, i32
  }
}

</mosaic_0001>

<llo_original>
// kernel: tpu_custom_call.1
$region0: #{tpu_custom_call.1}
  #allocation0 [shape = 'u32[]', space=smem, size = 0x4, offset = 0x4, fixed_abs, tag = 'smem constant byte address 0x4 - core index']
  #allocation1 [shape = 'u32[144,128]{1,0:T(1,128)}', space=vmem, size = 0x12000, scoped, tag = 'internal scratch']
  %s0 = inlined_call_operand.hbm [shape: f32[8,128], index: 0, kind: input, shape index: {}]
  %s1 = inlined_call_operand.hbm [shape: f32[16,128], index: 1, kind: output, shape index: {}]
  %s2 = sld [smem:[#allocation0]]
  $region41: #{tpu_custom_call.1} parent=0
    _
  %s4 = ssub.s32 1, %s2
  %s5 = scalar_select 0, %s4, %s2
  $region1: #{tpu_custom_call.1} parent=0
    #allocation2 [shape = 'u8[4096]{0}', space=vmem, size = 0x1000, scoped, tag = 'input window, operand 0, single buffered']
    #allocation3 [shape = 's32[2]{0}', space=sflag, size = 0x8, scoped, tag = 'scoped memory for tpu_custom_call.1']
    #allocation4 [shape = 's32[2]{0}', space=sflag, size = 0x8, scoped, tag = 'scoped memory for tpu_custom_call.1']
    #allocation5 [shape = 'u8[8192]{0}', space=vmem, size = 0x2000, scoped, tag = 'output window, operand 0']
    %6 = vsyncpa [#allocation3], 0
    %7 = vsyncpa [#allocation4], 0
    %s8 = scalar_lea.sflag [#allocation4], 1
    %9 = vsyncpa %s8, 0
    loop: start=0, step=1, limit=4
    $region2: #{tpu_custom_call.1} parent=1 // loop_pre_header
      _
    $region3: #{tpu_custom_call.1} parent=1 // loop_header
      %s11 = sphi 0, %s15
      %p12 = scmp.ge.s32.totalorder %s11, 4
      %s19 = sphi 0, %s19
      %s21 = sphi 0, %s19
      %s22 = sphi 0, %s21
      %s36 = sphi 0, %s22
      %s42 = sphi 0, %s44
      %s45 = sphi 0, %s42
      %s46 = sphi 0, %s45
      %s62 = sphi 0, %s46
    $region4: #{tpu_custom_call.1} parent=1 // loop_header_branch
      %14 = sbr.rel (%p12) target = $region8
    $region5: #{tpu_custom_call.1} parent=1 // loop_body
      %s16 = ssub.s32 %s11, 1
      %s17 = ssub.s32 %s11, 2
      %s18 = sadd.s32 %s11, 1
      %s20 = sadd.s32 %s19, 1
      %p23 = scmp.eq.s32.totalorder %s11, 1
      %p24 = scmp.ne.s32.totalorder %s19, %s21
      %p25 = scmp.eq.s32.totalorder %s11, 0
      %p26 = por %p24, %p25
      %p27 = scmp.ne.s32.totalorder %s19, %s21
      %p28 = scmp.eq.s32.totalorder %s16, 1
      %p29 = por %p27, %p28
      %p30 = scmp.ne.s32.totalorder %s21, %s22
      %p31 = scmp.eq.s32.totalorder %s16, 0
      %p32 = por %p30, %p31
      %p33 = scmp.ne.s32.totalorder %s21, %s22
      %p34 = scmp.eq.s32.totalorder %s17, 1
      %p35 = por %p33, %p34
      %p37 = scmp.ne.s32.totalorder %s22, %s36
      %p38 = scmp.eq.s32.totalorder %s17, 0
      %p39 = por %p37, %p38
      %s40 = ssub.s32 %s11, %s18
      %p41 = scmp.eq.s32.totalorder %s40, 0
      %s43 = sadd.s32 %s42, 1
      %s44 = scalar_select %p41, %s42, %s43
      %p47 = pneg %p41
      %p48 = scmp.eq.s32.totalorder %s11, 1
      %p49 = por %p47, %p48
      %p50 = scmp.ne.s32.totalorder %s42, %s45
      %p51 = scmp.eq.s32.totalorder %s11, 0
      %p52 = por %p50, %p51
      %p53 = scmp.ne.s32.totalorder %s42, %s45
      %p54 = scmp.eq.s32.totalorder %s16, 1
      %p55 = por %p53, %p54
      %p56 = scmp.ne.s32.totalorder %s45, %s46
      %p57 = scmp.eq.s32.totalorder %s16, 0
      %p58 = por %p56, %p57
      %p59 = scmp.ne.s32.totalorder %s45, %s46
      %p60 = scmp.eq.s32.totalorder %s17, 1
      %p61 = por %p59, %p60
      %p63 = scmp.ne.s32.totalorder %s46, %s62
      %p64 = scmp.eq.s32.totalorder %s17, 0
      %p65 = por %p63, %p64
      %p66 = scmp.le.s32.totalorder 1, %s11
      %p67 = scmp.lt.s32.totalorder %s11, 3
      %p68 = pnand %p66, %p67
      %p69 = pneg %p68
      // Predicated region
      $region9: #{tpu_custom_call.1} parent=5 // pred_check
        _
      $region10: #{tpu_custom_call.1} parent=5 // pred_check_branch
        %71 = sbr.rel (%p68) target = $region12
      $region11: #{tpu_custom_call.1} parent=5 // pred_region
        %s72 = ssub.s32 %s11, 1
        // Predicated region
        $region13: #{tpu_custom_call.1} parent=11 // pred_check
          %p73 = pneg %p32
        $region14: #{tpu_custom_call.1} parent=11 // pred_check_branch
          %75 = sbr.rel (%p73) target = $region16
        $region15: #{tpu_custom_call.1} parent=11 // pred_region
          %s77 = ssub.s32 128, 128
          %78 = vsyncadd [#allocation3], %s77
          %s80 = sshll.u32 [#allocation2], 4
          %s81 = int_to_ptr.vmem [resolvable:$true] %s80
          %83 = dma.hbm_to_vmem [thread:$0]  %s0, 128, %s81, [#allocation3]
        $region16: #{tpu_custom_call.1} parent=11 // pred_fallthru
          _
      $region12: #{tpu_custom_call.1} parent=5 // pred_fallthru
        _
      %p84 = scmp.lt.s32.totalorder %s11, 2
      // Predicated region
      $region17: #{tpu_custom_call.1} parent=5 // pred_check
        %p85 = pneg %p84
      $region18: #{tpu_custom_call.1} parent=5 // pred_check_branch
        %87 = sbr.rel (%p85) target = $region20
      $region19: #{tpu_custom_call.1} parent=5 // pred_region
        _
      $region20: #{tpu_custom_call.1} parent=5 // pred_fallthru
        _
      %p88 = scmp.le.s32.totalorder 1, %s11
      %p89 = scmp.lt.s32.totalorder %s11, 3
      %p90 = pnand %p88, %p89
      %p91 = pneg %p90
      // Predicated region
      $region21: #{tpu_custom_call.1} parent=5 // pred_check
        _
      $region22: #{tpu_custom_call.1} parent=5 // pred_check_branch
        %93 = sbr.rel (%p90) target = $region24
      $region23: #{tpu_custom_call.1} parent=5 // pred_region
        %s94 = ssub.s32 %s11, 1
        // Predicated region
        $region25: #{tpu_custom_call.1} parent=23 // pred_check
          %p95 = pneg %p32
        $region26: #{tpu_custom_call.1} parent=23 // pred_check_branch
          %97 = sbr.rel (%p95) target = $region28
        $region27: #{tpu_custom_call.1} parent=23 // pred_region
          %98 = dma.done [#allocation3], 128
        $region28: #{tpu_custom_call.1} parent=23 // pred_fallthru
          _
        %p99 = pneg %p32
        %p100 = pneg %p29
        %p101 = pneg %p58
        %p102 = pneg %p55
        %s103 = sand.u32 %s45, 1
        %s104 = scalar_lea.sflag [#allocation4], %s103
        %s105 = sand.u32 %s45, 1
        %s106 = smul.addr %s105, 8
        %s107 = scalar_lea.vmem [#allocation5], %s106
        %v108 = vld [vmem:[#allocation2] sm:$0xff]
        %v109 = vadd.f32 %v108, 1.0
        %110 = vst [vmem:[%s107] sm:$0xff] %v109
        %s111 = sand.u32 %s45, 1
        %s112 = scalar_lea.sflag [#allocation4], %s111
        %s113 = sand.u32 %s45, 1
        %s114 = smul.addr %s113, 8
        %s115 = scalar_lea.vmem [#allocation5], %s114
        // Predicated region
        $region29: #{tpu_custom_call.1} parent=23 // pred_check
          %p116 = pneg %p55
        $region30: #{tpu_custom_call.1} parent=23 // pred_check_branch
          %118 = sbr.rel (%p116) target = $region32
        $region31: #{tpu_custom_call.1} parent=23 // pred_region
          %s120 = ssub.s32 128, 128
          %121 = vsyncadd %s112, %s120
          %s122 = smul.addr %s16, 128
          %s123 = scalar_lea.hbm %s1, %s122
          %s125 = sshll.u32 %s115, 4
          %s126 = int_to_ptr.vmem [resolvable:$true] %s125
          %128 = dma.vmem_to_hbm [thread:$0]  %s126, 128, %s123, %s112
        $region32: #{tpu_custom_call.1} parent=23 // pred_fallthru
          _
      $region24: #{tpu_custom_call.1} parent=5 // pred_fallthru
        _
      %p129 = scmp.le.s32.totalorder 2, %s11
      // Predicated region
      $region33: #{tpu_custom_call.1} parent=5 // pred_check
        %p130 = pneg %p129
      $region34: #{tpu_custom_call.1} parent=5 // pred_check_branch
        %132 = sbr.rel (%p130) target = $region36
      $region35: #{tpu_custom_call.1} parent=5 // pred_region
        %s133 = ssub.s32 %s11, 2
        // Predicated region
        $region37: #{tpu_custom_call.1} parent=35 // pred_check
          %p134 = pneg %p61
        $region38: #{tpu_custom_call.1} parent=35 // pred_check_branch
          %136 = sbr.rel (%p134) target = $region40
        $region39: #{tpu_custom_call.1} parent=35 // pred_region
          %s137 = sand.u32 %s46, 1
          %s138 = scalar_lea.sflag [#allocation4], %s137
          %s139 = sand.u32 %s46, 1
          %s140 = smul.addr %s139, 8
          %s141 = scalar_lea.vmem [#allocation5], %s140
          %142 = dma.done %s138, 128
        $region40: #{tpu_custom_call.1} parent=35 // pred_fallthru
          _
      $region36: #{tpu_custom_call.1} parent=5 // pred_fallthru
        _
    $region6: #{tpu_custom_call.1} parent=1 // loop_footer
      %s15 = sadd.s32 1, %s11
    $region7: #{tpu_custom_call.1} parent=1 // loop_footer_branch
      %10 = sbr.rel target = $region3
    $region8: #{tpu_custom_call.1} parent=1 // loop_exit
      _
    %143 = vsyncpa [#allocation3], 1
    %s144 = scalar_lea.sflag [#allocation3], 1
    %145 = vsyncpa %s144, 1
    %146 = vsyncpa [#allocation4], 1
    %s147 = scalar_lea.sflag [#allocation4], 1
    %148 = vsyncpa %s147, 1

// kernel: mlp_forward.1
$region0: #{mlp_forward.1}
  #allocation0 [shape = 'u32[]', space=smem, size = 0x4, offset = 0x4, fixed_abs, tag = 'smem constant byte address 0x4 - core index']
  #allocation1 [shape = 'u32[144,128]{1,0:T(1,128)}', space=vmem, size = 0x12000, scoped, tag = 'internal scratch']
  %s0 = inlined_call_operand.vmem [shape: f32[8,16], index: 0, kind: input, shape index: {}]
  %s1 = inlined_call_operand.hbm [shape: f32[16,32], index: 1, kind: input, shape index: {}]
  %s2 = inlined_call_operand.vmem [shape: f32[1,32], index: 2, kind: input, shape index: {}]
  %s3 = inlined_call_operand.vmem [shape: f32[32,32], index: 3, kind: input, shape index: {}]
  %s4 = inlined_call_operand.hbm [shape: f32[1,32], index: 4, kind: input, shape index: {}]
  %s5 = inlined_call_operand.vmem [shape: f32[32,8], index: 5, kind: input, shape index: {}]
  %s6 = inlined_call_operand.vmem [shape: f32[1,8], index: 6, kind: input, shape index: {}]
  %s7 = inlined_call_operand.hbm [shape: f32[8,8], index: 7, kind: output, shape index: {}]
  %s8 = sld [smem:[#allocation0]]
  $region46: #{mlp_forward.1} parent=0
    _
  %s10 = ssub.s32 1, %s8
  %s11 = scalar_select 0, %s10, %s8
  $region1: #{mlp_forward.1} parent=0
    #allocation2 [shape = 'u8[8192]{0}', space=vmem, size = 0x2000, scoped, tag = 'input window, operand 1, single buffered']
    #allocation3 [shape = 's32[1]{0}', space=sflag, size = 0x4, scoped, tag = 'scoped memory for mlp_forward.1']
    #allocation4 [shape = 's32[1]{0}', space=sflag, size = 0x4, scoped, tag = 'scoped memory for mlp_forward.1']
    #allocation5 [shape = 'u8[512]{0}', space=vmem, size = 0x400, scoped, tag = 'input window, operand 4, single buffered']
    #allocation6 [shape = 's32[1]{0}', space=sflag, size = 0x4, scoped, tag = 'scoped memory for mlp_forward.1']
    #allocation7 [shape = 'u8[4096]{0}', space=vmem, size = 0x1000, scoped, tag = 'output window, operand 0, single buffered']
    %12 = vsyncpa [#allocation3], 0
    %13 = vsyncpa [#allocation6], 0
    %14 = vsyncpa [#allocation4], 0
    // Predicated region
    $region2: #{mlp_forward.1} parent=1 // pred_check
      _
    $region3: #{mlp_forward.1} parent=1 // pred_check_branch
      %16 = sbr.rel (0) target = $region5
    $region4: #{mlp_forward.1} parent=1 // pred_region
      _
    $region5: #{mlp_forward.1} parent=1 // pred_fallthru
      _
    // Predicated region
    $region6: #{mlp_forward.1} parent=1 // pred_check
      _
    $region7: #{mlp_forward.1} parent=1 // pred_check_branch
      %18 = sbr.rel (0) target = $region9
    $region8: #{mlp_forward.1} parent=1 // pred_region
      %s20 = ssub.s32 256, 256
      %21 = vsyncadd [#allocation3], %s20
      %s22 = sshll.u32 [#allocation2], 4
      %s23 = int_to_ptr.vmem [resolvable:$true] %s22
      %28 = dma.hbm_to_vmem [thread:$0]  %s1, 256, %s23, [#allocation3], 128, 128, 8
    $region9: #{mlp_forward.1} parent=1 // pred_fallthru
      _
    // Predicated region
    $region10: #{mlp_forward.1} parent=1 // pred_check
      _
    $region11: #{mlp_forward.1} parent=1 // pred_check_branch
      %30 = sbr.rel (0) target = $region13
    $region12: #{mlp_forward.1} parent=1 // pred_region
      _
    $region13: #{mlp_forward.1} parent=1 // pred_fallthru
      _
    // Predicated region
    $region14: #{mlp_forward.1} parent=1 // pred_check
      _
    $region15: #{mlp_forward.1} parent=1 // pred_check_branch
      %32 = sbr.rel (0) target = $region17
    $region16: #{mlp_forward.1} parent=1 // pred_region
      _
    $region17: #{mlp_forward.1} parent=1 // pred_fallthru
      _
    // Predicated region
    $region18: #{mlp_forward.1} parent=1 // pred_check
      _
    $region19: #{mlp_forward.1} parent=1 // pred_check_branch
      %34 = sbr.rel (0) target = $region21
    $region20: #{mlp_forward.1} parent=1 // pred_region
      %s36 = ssub.s32 16, 16
      %37 = vsyncadd [#allocation6], %s36
      %s39 = sshll.u32 [#allocation5], 4
      %s40 = int_to_ptr.vmem [resolvable:$true] %s39
      %42 = dma.hbm_to_vmem [thread:$0]  %s4, 16, %s40, [#allocation6]
    $region21: #{mlp_forward.1} parent=1 // pred_fallthru
      _
    // Predicated region
    $region22: #{mlp_forward.1} parent=1 // pred_check
      _
    $region23: #{mlp_forward.1} parent=1 // pred_check_branch
      %44 = sbr.rel (0) target = $region25
    $region24: #{mlp_forward.1} parent=1 // pred_region
      _
    $region25: #{mlp_forward.1} parent=1 // pred_fallthru
      _
    // Predicated region
    $region26: #{mlp_forward.1} parent=1 // pred_check
      _
    $region27: #{mlp_forward.1} parent=1 // pred_check_branch
      %46 = sbr.rel (0) target = $region29
    $region28: #{mlp_forward.1} parent=1 // pred_region
      _
    $region29: #{mlp_forward.1} parent=1 // pred_fallthru
      _
    // Predicated region
    $region30: #{mlp_forward.1} parent=1 // pred_check
      _
    $region31: #{mlp_forward.1} parent=1 // pred_check_branch
      %48 = sbr.rel (0) target = $region33
    $region32: #{mlp_forward.1} parent=1 // pred_region
      %49 = dma.done [#allocation3], 256
    $region33: #{mlp_forward.1} parent=1 // pred_fallthru
      _
    // Predicated region
    $region34: #{mlp_forward.1} parent=1 // pred_check
      _
    $region35: #{mlp_forward.1} parent=1 // pred_check_branch
      %51 = sbr.rel (0) target = $region37
    $region36: #{mlp_forward.1} parent=1 // pred_region
      %52 = dma.done [#allocation6], 16
    $region37: #{mlp_forward.1} parent=1 // pred_fallthru
      _
    %v53 = vld [vmem:[%s0] sm:$0xff]
    %v54 = vld [vmem:[#allocation2] sm:$0xff]
    %v55 = vld [vmem:[#allocation2 + $0x8] sm:$0xff]
    %v56 = vld [vmem:[%s2] sm:$0x1]
    %v58 = vlaneseq
    %v59 = vshrl.u32 %v58, 7
    %v60 = vsub.s32 0, %v59
    %v61 = vrot.slane %v56, %v60
    %vm63 = vcmask 130048
    %v65 = vsel %vm63, %v53, 0
    %67 = vmatprep.subr.mxu0 0.0
    %68 = vmatpush1.msra.mxu0 0.0
    %69 = vmatprep.subr.mxu0 0.0
    %70 = vmatpush1.msra.mxu0 0.0
    %71 = vmatprep.subr.mxu0 0.0
    %72 = vmatpush1.msra.mxu0 0.0
    %73 = vmatprep.subr.mxu0 0.0
    %74 = vmatpush1.msra.mxu0 0.0
    %75 = vmatprep.subr.mxu0 0.0
    %76 = vmatpush1.msra.mxu0 0.0
    %77 = vmatprep.subr.mxu0 0.0
    %78 = vmatpush1.msra.mxu0 0.0
    %79 = vmatprep.subr.mxu0 0.0
    %80 = vmatpush1.msra.mxu0 0.0
    %81 = vmatprep.subr.mxu0 0.0
    %82 = vmatpush1.msra.mxu0 0.0
    %83 = vmatprep.subr.mxu0 0.0
    %84 = vmatpush1.msra.mxu0 0.0
    %85 = vmatprep.subr.mxu0 0.0
    %86 = vmatpush1.msra.mxu0 0.0
    %87 = vmatprep.subr.mxu0 0.0
    %88 = vmatpush1.msra.mxu0 0.0
    %89 = vmatprep.subr.mxu0 0.0
    %90 = vmatpush1.msra.mxu0 0.0
    %91 = vmatprep.subr.mxu0 0.0
    %92 = vmatpush1.msra.mxu0 0.0
    %93 = vmatprep.subr.mxu0 0.0
    %94 = vmatpush1.msra.mxu0 0.0
    %95 = vmatprep.subr.mxu0 0.0
    %96 = vmatpush1.msra.mxu0 %v55
    %97 = vmatprep.subr.mxu0 0.0
    %98 = vmatpush1.msra.mxu0 %v54
    %99 = vmatprep.subr.mxu0 0.0
    %100 = vmatpush2.msra.mxu0 0.0
    %101 = vmatprep.subr.mxu0 0.0
    %102 = vmatpush2.msra.mxu0 0.0
    %103 = vmatprep.subr.mxu0 0.0
    %104 = vmatpush2.msra.mxu0 0.0
    %105 = vmatprep.subr.mxu0 0.0
    %106 = vmatpush2.msra.mxu0 0.0
    %107 = vmatprep.subr.mxu0 0.0
    %108 = vmatpush2.msra.mxu0 0.0
    %109 = vmatprep.subr.mxu0 0.0
    %110 = vmatpush2.msra.mxu0 0.0
    %111 = vmatprep.subr.mxu0 0.0
    %112 = vmatpush2.msra.mxu0 0.0
    %113 = vmatprep.subr.mxu0 0.0
    %114 = vmatpush2.msra.mxu0 0.0
    %115 = vmatprep.subr.mxu0 0.0
    %116 = vmatpush2.msra.mxu0 0.0
    %117 = vmatprep.subr.mxu0 0.0
    %118 = vmatpush2.msra.mxu0 0.0
    %119 = vmatprep.subr.mxu0 0.0
    %120 = vmatpush2.msra.mxu0 0.0
    %121 = vmatprep.subr.mxu0 0.0
    %122 = vmatpush2.msra.mxu0 0.0
    %123 = vmatprep.subr.mxu0 0.0
    %124 = vmatpush2.msra.mxu0 0.0
    %125 = vmatprep.subr.mxu0 0.0
    %126 = vmatpush2.msra.mxu0 0.0
    %127 = vmatprep.subr.mxu0 0.0
    %128 = vmatpush2.msra.mxu0 0.0
    %129 = vmatprep.subr.mxu0 0.0
    %130 = vmatpush2.msra.mxu0 0.0
    %131 = vmatprep.mubr.f32.mxu0 0.0
    %132 = vmatmul.mubr.f32.gmra.mxu0 %v65
    %v133 = vpop.f32.mrf.mxu0
    %v134 = vadd.f32 %v61, %v133
    %v135 = vpop.f32.mrf.mxu0
    %136 = vdwg.mxu0
    %v137 = vmax.f32 %v134, 0.0
    %v138 = vld [vmem:[%s3] sm:$0xff]
    %v139 = vld [vmem:[%s3 + $0x8] sm:$0xff]
    %v140 = vld [vmem:[%s3 + $0x10] sm:$0xff]
    %v141 = vld [vmem:[%s3 + $0x18] sm:$0xff]
    %v142 = vld [vmem:[#allocation5] sm:$0x1]
    %v144 = vlaneseq
    %v145 = vshrl.u32 %v144, 7
    %v146 = vsub.s32 0, %v145
    %v147 = vrot.slane %v142, %v146
    %vm149 = vcmask 261120
    %v151 = vsel %vm149, %v137, 0
    %153 = vmatprep.subr.mxu0 0.0
    %154 = vmatpush1.msra.mxu0 0.0
    %155 = vmatprep.subr.mxu0 0.0
    %156 = vmatpush1.msra.mxu0 0.0
    %157 = vmatprep.subr.mxu0 0.0
    %158 = vmatpush1.msra.mxu0 0.0
    %159 = vmatprep.subr.mxu0 0.0
    %160 = vmatpush1.msra.mxu0 0.0
    %161 = vmatprep.subr.mxu0 0.0
    %162 = vmatpush1.msra.mxu0 0.0
    %163 = vmatprep.subr.mxu0 0.0
    %164 = vmatpush1.msra.mxu0 0.0
    %165 = vmatprep.subr.mxu0 0.0
    %166 = vmatpush1.msra.mxu0 0.0
    %167 = vmatprep.subr.mxu0 0.0
    %168 = vmatpush1.msra.mxu0 0.0
    %169 = vmatprep.subr.mxu0 0.0
    %170 = vmatpush1.msra.mxu0 0.0
    %171 = vmatprep.subr.mxu0 0.0
    %172 = vmatpush1.msra.mxu0 0.0
    %173 = vmatprep.subr.mxu0 0.0
    %174 = vmatpush1.msra.mxu0 0.0
    %175 = vmatprep.subr.mxu0 0.0
    %176 = vmatpush1.msra.mxu0 0.0
    %177 = vmatprep.subr.mxu0 0.0
    %178 = vmatpush1.msra.mxu0 %v141
    %179 = vmatprep.subr.mxu0 0.0
    %180 = vmatpush1.msra.mxu0 %v140
    %181 = vmatprep.subr.mxu0 0.0
    %182 = vmatpush1.msra.mxu0 %v139
    %183 = vmatprep.subr.mxu0 0.0
    %184 = vmatpush1.msra.mxu0 %v138
    %185 = vmatprep.subr.mxu0 0.0
    %186 = vmatpush2.msra.mxu0 0.0
    %187 = vmatprep.subr.mxu0 0.0
    %188 = vmatpush2.msra.mxu0 0.0
    %189 = vmatprep.subr.mxu0 0.0
    %190 = vmatpush2.msra.mxu0 0.0
    %191 = vmatprep.subr.mxu0 0.0
    %192 = vmatpush2.msra.mxu0 0.0
    %193 = vmatprep.subr.mxu0 0.0
    %194 = vmatpush2.msra.mxu0 0.0
    %195 = vmatprep.subr.mxu0 0.0
    %196 = vmatpush2.msra.mxu0 0.0
    %197 = vmatprep.subr.mxu0 0.0
    %198 = vmatpush2.msra.mxu0 0.0
    %199 = vmatprep.subr.mxu0 0.0
    %200 = vmatpush2.msra.mxu0 0.0
    %201 = vmatprep.subr.mxu0 0.0
    %202 = vmatpush2.msra.mxu0 0.0
    %203 = vmatprep.subr.mxu0 0.0
    %204 = vmatpush2.msra.mxu0 0.0
    %205 = vmatprep.subr.mxu0 0.0
    %206 = vmatpush2.msra.mxu0 0.0
    %207 = vmatprep.subr.mxu0 0.0
    %208 = vmatpush2.msra.mxu0 0.0
    %209 = vmatprep.subr.mxu0 0.0
    %210 = vmatpush2.msra.mxu0 0.0
    %211 = vmatprep.subr.mxu0 0.0
    %212 = vmatpush2.msra.mxu0 0.0
    %213 = vmatprep.subr.mxu0 0.0
    %214 = vmatpush2.msra.mxu0 0.0
    %215 = vmatprep.subr.mxu0 0.0
    %216 = vmatpush2.msra.mxu0 0.0
    %217 = vmatprep.mubr.f32.mxu0 0.0
    %218 = vmatmul.mubr.f32.gmra.mxu0 %v151
    %v219 = vpop.f32.mrf.mxu0
    %v220 = vadd.f32 %v147, %v219
    %v221 = vpop.f32.mrf.mxu0
    %222 = vdwg.mxu0
    %v223 = vmax.f32 %v220, 0.0
    %v224 = vld [vmem:[%s5] sm:$0xff]
    %v225 = vld [vmem:[%s5 + $0x8] sm:$0xff]
    %v226 = vld [vmem:[%s5 + $0x10] sm:$0xff]
    %v227 = vld [vmem:[%s5 + $0x18] sm:$0xff]
    %v228 = vld [vmem:[%s6] sm:$0x1]
    %v230 = vlaneseq
    %v231 = vshrl.u32 %v230, 7
    %v232 = vsub.s32 0, %v231
    %v233 = vrot.slane %v228, %v232
    %v236 = vsel %vm149, %v223, 0
    %238 = vmatprep.subr.mxu0 0.0
    %239 = vmatpush1.msra.mxu0 0.0
    %240 = vmatprep.subr.mxu0 0.0
    %241 = vmatpush1.msra.mxu0 0.0
    %242 = vmatprep.subr.mxu0 0.0
    %243 = vmatpush1.msra.mxu0 0.0
    %244 = vmatprep.subr.mxu0 0.0
    %245 = vmatpush1.msra.mxu0 0.0
    %246 = vmatprep.subr.mxu0 0.0
    %247 = vmatpush1.msra.mxu0 0.0
    %248 = vmatprep.subr.mxu0 0.0
    %249 = vmatpush1.msra.mxu0 0.0
    %250 = vmatprep.subr.mxu0 0.0
    %251 = vmatpush1.msra.mxu0 0.0
    %252 = vmatprep.subr.mxu0 0.0
    %253 = vmatpush1.msra.mxu0 0.0
    %254 = vmatprep.subr.mxu0 0.0
    %255 = vmatpush1.msra.mxu0 0.0
    %256 = vmatprep.subr.mxu0 0.0
    %257 = vmatpush1.msra.mxu0 0.0
    %258 = vmatprep.subr.mxu0 0.0
    %259 = vmatpush1.msra.mxu0 0.0
    %260 = vmatprep.subr.mxu0 0.0
    %261 = vmatpush1.msra.mxu0 0.0
    %262 = vmatprep.subr.mxu0 0.0
    %263 = vmatpush1.msra.mxu0 %v227
    %264 = vmatprep.subr.mxu0 0.0
    %265 = vmatpush1.msra.mxu0 %v226
    %266 = vmatprep.subr.mxu0 0.0
    %267 = vmatpush1.msra.mxu0 %v225
    %268 = vmatprep.subr.mxu0 0.0
    %269 = vmatpush1.msra.mxu0 %v224
    %270 = vmatprep.subr.mxu0 0.0
    %271 = vmatpush2.msra.mxu0 0.0
    %272 = vmatprep.subr.mxu0 0.0
    %273 = vmatpush2.msra.mxu0 0.0
    %274 = vmatprep.subr.mxu0 0.0
    %275 = vmatpush2.msra.mxu0 0.0
    %276 = vmatprep.subr.mxu0 0.0
    %277 = vmatpush2.msra.mxu0 0.0
    %278 = vmatprep.subr.mxu0 0.0
    %279 = vmatpush2.msra.mxu0 0.0
    %280 = vmatprep.subr.mxu0 0.0
    %281 = vmatpush2.msra.mxu0 0.0
    %282 = vmatprep.subr.mxu0 0.0
    %283 = vmatpush2.msra.mxu0 0.0
    %284 = vmatprep.subr.mxu0 0.0
    %285 = vmatpush2.msra.mxu0 0.0
    %286 = vmatprep.subr.mxu0 0.0
    %287 = vmatpush2.msra.mxu0 0.0
    %288 = vmatprep.subr.mxu0 0.0
    %289 = vmatpush2.msra.mxu0 0.0
    %290 = vmatprep.subr.mxu0 0.0
    %291 = vmatpush2.msra.mxu0 0.0
    %292 = vmatprep.subr.mxu0 0.0
    %293 = vmatpush2.msra.mxu0 0.0
    %294 = vmatprep.subr.mxu0 0.0
    %295 = vmatpush2.msra.mxu0 0.0
    %296 = vmatprep.subr.mxu0 0.0
    %297 = vmatpush2.msra.mxu0 0.0
    %298 = vmatprep.subr.mxu0 0.0
    %299 = vmatpush2.msra.mxu0 0.0
    %300 = vmatprep.subr.mxu0 0.0
    %301 = vmatpush2.msra.mxu0 0.0
    %302 = vmatprep.mubr.f32.mxu0 0.0
    %303 = vmatmul.mubr.f32.gmra.mxu0 %v236
    %v304 = vpop.f32.mrf.mxu0
    %v305 = vadd.f32 %v233, %v304
    %v306 = vpop.f32.mrf.mxu0
    %307 = vdwg.mxu0
    %vm308 = vcmask 64512
    %309 = vst.msk [vmem:[#allocation7] sm:$0xff] %vm308, %v305
    // Predicated region
    $region38: #{mlp_forward.1} parent=1 // pred_check
      _
    $region39: #{mlp_forward.1} parent=1 // pred_check_branch
      %311 = sbr.rel (0) target = $region41
    $region40: #{mlp_forward.1} parent=1 // pred_region
      %s313 = ssub.s32 128, 128
      %314 = vsyncadd [#allocation4], %s313
      %s316 = sshll.u32 [#allocation7], 4
      %s317 = int_to_ptr.vmem [resolvable:$true] %s316
      %319 = dma.vmem_to_hbm [thread:$0]  %s317, 128, %s7, [#allocation4]
    $region41: #{mlp_forward.1} parent=1 // pred_fallthru
      _
    // Predicated region
    $region42: #{mlp_forward.1} parent=1 // pred_check
      _
    $region43: #{mlp_forward.1} parent=1 // pred_check_branch
      %321 = sbr.rel (0) target = $region45
    $region44: #{mlp_forward.1} parent=1 // pred_region
      %322 = dma.done [#allocation4], 128
    $region45: #{mlp_forward.1} parent=1 // pred_fallthru
      _
    %323 = vsyncpa [#allocation3], 1
    %324 = vsyncpa [#allocation6], 1
    %325 = vsyncpa [#allocation4], 1

</llo_original>
